<compile_context>
chip_gen: v5e
topology: v5e:2x2
jax: 0.10.0
libtpu: 0.0.40
codegen_flags: <defaults>
</compile_context>

<pallas_src>
import jax
import jax.numpy as jnp
from jax import lax
from jax.experimental import pallas as pl
from jax.experimental.pallas import tpu as pltpu


# ----------------------------------------------------------------------------- kernel
def _temporal_embed_kernel(off_ref, idx_ref, tab_ref, o_ref):
    # off_ref : (F,)   int32 SMEM   lane offset of each feature's sub-table
    # idx_ref : (TR,F) int32 VMEM   raw per-feature marks for this row tile
    # tab_ref : (V_pad, d_model) bf16  concatenated [month|day|weekday|hour|minute]
    # o_ref   : (TR, d_model)          output tile
    idx = idx_ref[...]                                            # (TR, F)
    tr, n_feat = idx.shape
    v_pad = tab_ref.shape[0]

    lane = lax.broadcasted_iota(jnp.int32, (tr, v_pad), 1)        # vocab id per lane
    # disjoint feature segments -> OR of one-hots == summed multi-hot (values 0/1)
    hit = lane == (idx[:, 0:1] + off_ref[0])
    for f in range(1, n_feat):                                    # static, F <= 5
        hit = jnp.logical_or(hit, lane == (idx[:, f:f + 1] + off_ref[f]))
    sel = hit.astype(tab_ref.dtype)                               # bf16 0/1, exact

    # one single-pass bf16 MXU matmul = all embedding lookups + their sum
    acc = jnp.dot(sel, tab_ref[...], preferred_element_type=jnp.float32)
    o_ref[...] = acc.astype(o_ref.dtype)


# ----------------------------------------------------------------------------- wrapper
def _pick_row_tile(n, max_rows):
    """Largest multiple of 8 that divides n and is <= max_rows (0 if none)."""
    best, t, limit = 0, 8, min(n, max_rows)
    while t <= limit:
        if n % t == 0:
            best = t
        t += 8
    return best


def pack_temporal_tables(tables, table_dtype=jnp.bfloat16):
    """One-time prep (hoist out of forward): concat per-feature tables into a single
    zero-padded lane-dense (V_pad, d_model) table + int32 lane offsets."""
    offsets, acc = [], 0
    for t in tables:
        offsets.append(acc)
        acc += int(t.shape[0])
    v_pad = max(128, ((acc + 127) // 128) * 128)                  # keep K = 128
    table = jnp.concatenate([t.astype(jnp.float32) for t in tables], axis=0)
    table = jnp.pad(table, ((0, v_pad - acc), (0, 0))).astype(table_dtype)
    return table, jnp.asarray(offsets, jnp.int32)


def temporal_embedding_forward(x, packed, *, max_rows=1024, out_dtype=jnp.float32):
    """x: [B, L, M] integer marks; packed: (table, offsets) from pack_temporal_tables."""
    table, offsets = packed
    B, L = x.shape[0], x.shape[1]
    F = int(offsets.shape[0])
    v_pad, d_model = table.shape
    N = B * L

    idx = x[..., :F].astype(jnp.int32).reshape(N, F)              # free-ish reshape

    row_tile = _pick_row_tile(N, max_rows)
    padded = row_tile == 0
    if padded:                                                    # ragged fallback only
        row_tile = min(max_rows, ((N + 7) // 8) * 8)
        n_rows = ((N + row_tile - 1) // row_tile) * row_tile
        idx = jnp.pad(idx, ((0, n_rows - N), (0, 0)))
    else:
        n_rows = N

    out = pl.pallas_call(
        _temporal_embed_kernel,
        out_shape=jax.ShapeDtypeStruct((n_rows, d_model), out_dtype),
        grid_spec=pltpu.PrefetchScalarGridSpec(
            num_scalar_prefetch=1,                                # offsets -> SMEM
            grid=(n_rows // row_tile,),
            in_specs=[
                pl.BlockSpec((row_tile, F), lambda i, off: (i, 0)),
                pl.BlockSpec((v_pad, d_model), lambda i, off: (0, 0)),  # grid-invariant
            ],
            out_specs=pl.BlockSpec((row_tile, d_model), lambda i, off: (i, 0)),
        ),
        compiler_params=pltpu.CompilerParams(dimension_semantics=("parallel",)),
    )(offsets, idx, table)

    if padded:
        out = out[:N]
    return out.reshape(B, L, d_model)


# ----------------------------------------------------------------------------- reference / params
def _reference(x, tables):
    """Pure-JAX reference of the PyTorch forward (sum of embedding lookups)."""
    out = jnp.zeros(x.shape[:2] + (tables[0].shape[1],), jnp.float32)
    for f, tab in enumerate(tables):
        out = out + tab[x[..., f].astype(jnp.int32)]
    return out


def make_temporal_embedding_params(d_model, freq, key):
    """nn.Embedding-style N(0,1) tables, returned in feature-column order."""
    ks = jax.random.split(key, 5)
    month = jax.random.normal(ks[0], (13, d_model), jnp.float32)
    day = jax.random.normal(ks[1], (32, d_model), jnp.float32)
    weekday = jax.random.normal(ks[2], (7, d_model), jnp.float32)
    hour = jax.random.normal(ks[3], (24, d_model), jnp.float32)
    tables = [month, day, weekday, hour]
    if freq == 't':
        minute = jax.random.normal(ks[4], (4, d_model), jnp.float32)
        tables.append(minute)
    return tables


if __name__ == "__main__":
    B, L, d_model = 2, 16, 32

    key = jax.random.PRNGKey(0)
    k_params, kx = jax.random.split(key, 2)

    # integer time-feature marks within each table's vocabulary
    maxes = jnp.asarray([13, 32, 7, 24, 4], jnp.int32)            # month,day,weekday,hour,minute
    xu = jax.random.uniform(kx, (B, L, 5), jnp.float32)
    x = jnp.clip(jnp.floor(xu * maxes.astype(jnp.float32)).astype(jnp.int32), 0, maxes - 1)

    for freq in ("h", "t"):                                       # without / with minute_embed
        tables = make_temporal_embedding_params(d_model, freq, k_params)
        packed = pack_temporal_tables(tables)                     # one-time, hoisted prep
        xf = x[..., :len(tables)]

        out = jax.block_until_ready(temporal_embedding_forward(xf, packed))
        assert out.shape == (B, L, d_model)

        # tight check vs. reference using the same bf16-quantized tables (exact semantics)
        ref_q = _reference(xf, [t.astype(jnp.bfloat16).astype(jnp.float32) for t in tables])
        assert jnp.allclose(out, ref_q, atol=1e-4, rtol=1e-4), f"freq='{freq}' mismatch vs bf16-table reference"

        # loose sanity check vs. full-f32 PyTorch semantics (bf16 table quantization only)
        ref_f = _reference(xf, tables)
        assert jnp.allclose(out, ref_f, atol=1e-1), f"freq='{freq}' too far from f32 reference"

    print("KERNEL_OK")
</pallas_src>

<mosaic_0001>
module attributes {stable_mosaic.version = 11 : i64} {
  func.func @_temporal_embed_kernel(%arg0: i32, %arg1: memref<4xi32, #tpu.memory_space<smem>>, %arg2: memref<32x4xi32, #tpu.memory_space<vmem>>, %arg3: memref<128x32xbf16, #tpu.memory_space<vmem>>, %arg4: memref<32x32xf32, #tpu.memory_space<vmem>>) attributes {dimension_semantics = [#tpu.dimension_semantics<parallel>], iteration_bounds = array<i64: 1>, scalar_prefetch = 1 : i64, scratch_operands = 0 : i64, tpu.core_type = #tpu.core_type<tc>, window_params = [{transform_indices = @transform_0, window_bounds = array<i64: 32, 4>}, {pipeline_mode = #tpu.pipeline_mode<synchronous>, transform_indices = @transform_1, window_bounds = array<i64: 128, 32>}, {transform_indices = @transform_2, window_bounds = array<i64: 32, 32>}]} {
    %c0 = arith.constant 0 : index
    %c0_0 = arith.constant 0 : index
    %0 = vector.load %arg2[%c0, %c0_0] : memref<32x4xi32, #tpu.memory_space<vmem>>, vector<32x4xi32>
    %1 = tpu.iota {dimensions = array<i32: 1>} : vector<32x128xi32>
    %2 = vector.extract_strided_slice %0 {offsets = [0, 0], sizes = [32, 1], strides = [1, 1]} : vector<32x4xi32> to vector<32x1xi32>
    %c0_1 = arith.constant 0 : index
    %3 = memref.load %arg1[%c0_1] : memref<4xi32, #tpu.memory_space<smem>>
    %4 = vector.broadcast %3 : i32 to vector<32x1xi32>
    %5 = arith.addi %2, %4 : vector<32x1xi32>
    %6 = vector.broadcast %5 : vector<32x1xi32> to vector<32x128xi32>
    %7 = arith.cmpi eq, %1, %6 : vector<32x128xi32>
    %8 = vector.extract_strided_slice %0 {offsets = [0, 1], sizes = [32, 1], strides = [1, 1]} : vector<32x4xi32> to vector<32x1xi32>
    %c1 = arith.constant 1 : index
    %9 = memref.load %arg1[%c1] : memref<4xi32, #tpu.memory_space<smem>>
    %10 = vector.broadcast %9 : i32 to vector<32x1xi32>
    %11 = arith.addi %8, %10 : vector<32x1xi32>
    %12 = vector.broadcast %11 : vector<32x1xi32> to vector<32x128xi32>
    %13 = arith.cmpi eq, %1, %12 : vector<32x128xi32>
    %14 = arith.ori %7, %13 : vector<32x128xi1>
    %15 = vector.extract_strided_slice %0 {offsets = [0, 2], sizes = [32, 1], strides = [1, 1]} : vector<32x4xi32> to vector<32x1xi32>
    %c2 = arith.constant 2 : index
    %16 = memref.load %arg1[%c2] : memref<4xi32, #tpu.memory_space<smem>>
    %17 = vector.broadcast %16 : i32 to vector<32x1xi32>
    %18 = arith.addi %15, %17 : vector<32x1xi32>
    %19 = vector.broadcast %18 : vector<32x1xi32> to vector<32x128xi32>
    %20 = arith.cmpi eq, %1, %19 : vector<32x128xi32>
    %21 = arith.ori %14, %20 : vector<32x128xi1>
    %22 = vector.extract_strided_slice %0 {offsets = [0, 3], sizes = [32, 1], strides = [1, 1]} : vector<32x4xi32> to vector<32x1xi32>
    %c3 = arith.constant 3 : index
    %23 = memref.load %arg1[%c3] : memref<4xi32, #tpu.memory_space<smem>>
    %24 = vector.broadcast %23 : i32 to vector<32x1xi32>
    %25 = arith.addi %22, %24 : vector<32x1xi32>
    %26 = vector.broadcast %25 : vector<32x1xi32> to vector<32x128xi32>
    %27 = arith.cmpi eq, %1, %26 : vector<32x128xi32>
    %28 = arith.ori %21, %27 : vector<32x128xi1>
    %29 = arith.extui %28 : vector<32x128xi1> to vector<32x128xi32>
    %30 = arith.sitofp %29 : vector<32x128xi32> to vector<32x128xf32>
    %31 = arith.truncf %30 : vector<32x128xf32> to vector<32x128xbf16>
    %c0_2 = arith.constant 0 : index
    %c0_3 = arith.constant 0 : index
    %32 = vector.load %arg3[%c0_2, %c0_3] : memref<128x32xbf16, #tpu.memory_space<vmem>>, vector<128x32xbf16>
    %cst = arith.constant dense<0.000000e+00> : vector<32x32xf32>
    %33 = tpu.matmul %31, %32, %cst {dimension_numbers = #tpu.dot_dimension_numbers<[1], [0], [0], [1], [0, 0, 1, 1], [], []>} : vector<32x128xbf16>, vector<128x32xbf16>, vector<32x32xf32> -> vector<32x32xf32>
    %c0_4 = arith.constant 0 : index
    %c0_5 = arith.constant 0 : index
    %34 = vector.load %arg4[%c0_4, %c0_5] : memref<32x32xf32, #tpu.memory_space<vmem>>, vector<32x32xf32>
    tpu.vector_store %arg4[%c0_4, %c0_5], %33 {strides = array<i32>} : memref<32x32xf32, #tpu.memory_space<vmem>>, vector<32x32xf32>,
    return
  }
  func.func @transform_0(%arg0: i32, %arg1: memref<4xi32, #tpu.memory_space<smem>>) -> (i32, i32) {
    %c0_i32 = arith.constant 0 : i32
    %c0_i32_0 = arith.constant 0 : i32
    return %arg0, %c0_i32 : i32, i32
  }
  func.func @transform_1(%arg0: i32, %arg1: memref<4xi32, #tpu.memory_space<smem>>) -> (i32, i32) {
    %c0_i32 = arith.constant 0 : i32
    %c0_i32_0 = arith.constant 0 : i32
    %c0_i32_1 = arith.constant 0 : i32
    return %c0_i32, %c0_i32_0 : i32, i32
  }
  func.func @transform_2(%arg0: i32, %arg1: memref<4xi32, #tpu.memory_space<smem>>) -> (i32, i32) {
    %c0_i32 = arith.constant 0 : i32
    %c0_i32_0 = arith.constant 0 : i32
    return %arg0, %c0_i32 : i32, i32
  }
}

</mosaic_0001>

<llo_original>
// kernel: tpu_custom_call.1
$region0: #{tpu_custom_call.1}
  #allocation0 [shape = 'u32[]', space=smem, size = 0x4, offset = 0x4, fixed_abs, tag = 'smem constant byte address 0x4 - core index']
  #allocation1 [shape = 'u32[72,128]{1,0:T(1,128)}', space=vmem, size = 0x9000, scoped, tag = 'internal scratch']
  #allocation2 [shape = 's32[1]{0}', space=sflag, size = 0x4, scoped, tag = 'scoped memory for tpu_custom_call.1']
  #allocation3 [shape = 'u8[512]{0}', space=smem, size = 0x200, scoped, tag = 'prefetched SMEM operand 0']
  %s0 = inlined_call_operand.vmem [shape: s32[4], index: 0, kind: input, shape index: {}]
  %s1 = inlined_call_operand.vmem [shape: s32[32,4], index: 1, kind: input, shape index: {}]
  %s2 = inlined_call_operand.vmem [shape: bf16[128,32], index: 2, kind: input, shape index: {}]
  %s3 = inlined_call_operand.hbm [shape: f32[32,32], index: 3, kind: output, shape index: {}]
  %s4 = sld [smem:[#allocation0]]
  $region18: #{tpu_custom_call.1} parent=0
    _
  %s6 = ssub.s32 1, %s4
  %s7 = scalar_select 0, %s6, %s4
  %s9 = sshll.u32 %s0, 4
  %s10 = int_to_ptr.vmem [resolvable:$true] %s9
  %12 = dma.vmem_to_smem %s10, 16, [#allocation3], [#allocation2]
  %14 = dma.done [#allocation2], 16
  %15 = sfence
  $region1: #{tpu_custom_call.1} parent=0
    #allocation4 [shape = 'u8[16384]{0}', space=vmem, size = 0x4000, scoped, tag = 'output window, operand 0, single buffered']
    #allocation5 [shape = 's32[1]{0}', space=sflag, size = 0x4, scoped, tag = 'scoped memory for tpu_custom_call.1']
    %16 = vsyncpa [#allocation5], 0
    // Predicated region
    $region2: #{tpu_custom_call.1} parent=1 // pred_check
      _
    $region3: #{tpu_custom_call.1} parent=1 // pred_check_branch
      %18 = sbr.rel (0) target = $region5
    $region4: #{tpu_custom_call.1} parent=1 // pred_region
      _
    $region5: #{tpu_custom_call.1} parent=1 // pred_fallthru
      _
    // Predicated region
    $region6: #{tpu_custom_call.1} parent=1 // pred_check
      _
    $region7: #{tpu_custom_call.1} parent=1 // pred_check_branch
      %20 = sbr.rel (0) target = $region9
    $region8: #{tpu_custom_call.1} parent=1 // pred_region
      _
    $region9: #{tpu_custom_call.1} parent=1 // pred_fallthru
      _
    %v21 = vld [vmem:[%s1] sm:$0xff]
    %v22 = vld [vmem:[%s1 + $0x8] sm:$0xff]
    %v23 = vld [vmem:[%s1 + $0x10] sm:$0xff]
    %v24 = vld [vmem:[%s1 + $0x18] sm:$0xff]
    %v25 = vlaneseq
    %v26 = vand.u32 %v25, 127
    %s27 = sld [smem:[#allocation3]]
    %v28 = vstv %s27
    %v29 = vadd.s32 %v21, %v28
    %v30 = vadd.s32 %v22, %v28
    %v31 = vadd.s32 %v23, %v28
    %v32 = vadd.s32 %v24, %v28
    %33 = vset.pattern.permute.xlu0 0
    %34 = vperm.xlu0 %33, %v29
    %v35 = vpop.permute.xlu0 %34
    %36 = vset.pattern.permute.xlu0 0
    %37 = vperm.xlu0 %36, %v30
    %v38 = vpop.permute.xlu0 %37
    %39 = vset.pattern.permute.xlu0 0
    %40 = vperm.xlu0 %39, %v31
    %v41 = vpop.permute.xlu0 %40
    %42 = vset.pattern.permute.xlu0 0
    %43 = vperm.xlu0 %42, %v32
    %v44 = vpop.permute.xlu0 %43
    %vm45 = vcmp.eq.s32.totalorder %v26, %v35
    %vm46 = vcmp.eq.s32.totalorder %v26, %v38
    %vm47 = vcmp.eq.s32.totalorder %v26, %v41
    %vm48 = vcmp.eq.s32.totalorder %v26, %v44
    %s49 = sld [smem:[#allocation3 + $0x1]]
    %v50 = vstv %s49
    %v51 = vadd.s32 %v21, %v50
    %v52 = vadd.s32 %v22, %v50
    %v53 = vadd.s32 %v23, %v50
    %v54 = vadd.s32 %v24, %v50
    %55 = vset.pattern.permute.xlu0 1
    %56 = vperm.xlu0 %55, %v51
    %v57 = vpop.permute.xlu0 %56
    %58 = vset.pattern.permute.xlu0 1
    %59 = vperm.xlu0 %58, %v52
    %v60 = vpop.permute.xlu0 %59
    %61 = vset.pattern.permute.xlu0 1
    %62 = vperm.xlu0 %61, %v53
    %v63 = vpop.permute.xlu0 %62
    %64 = vset.pattern.permute.xlu0 1
    %65 = vperm.xlu0 %64, %v54
    %v66 = vpop.permute.xlu0 %65
    %vm67 = vcmp.eq.s32.totalorder %v26, %v57
    %vm68 = vcmp.eq.s32.totalorder %v26, %v60
    %vm69 = vcmp.eq.s32.totalorder %v26, %v63
    %vm70 = vcmp.eq.s32.totalorder %v26, %v66
    %vm71 = vmor %vm45, %vm67
    %vm72 = vmor %vm46, %vm68
    %vm73 = vmor %vm47, %vm69
    %vm74 = vmor %vm48, %vm70
    %s75 = sld [smem:[#allocation3 + $0x2]]
    %v76 = vstv %s75
    %v77 = vadd.s32 %v21, %v76
    %v78 = vadd.s32 %v22, %v76
    %v79 = vadd.s32 %v23, %v76
    %v80 = vadd.s32 %v24, %v76
    %81 = vset.pattern.permute.xlu0 2
    %82 = vperm.xlu0 %81, %v77
    %v83 = vpop.permute.xlu0 %82
    %84 = vset.pattern.permute.xlu0 2
    %85 = vperm.xlu0 %84, %v78
    %v86 = vpop.permute.xlu0 %85
    %87 = vset.pattern.permute.xlu0 2
    %88 = vperm.xlu0 %87, %v79
    %v89 = vpop.permute.xlu0 %88
    %90 = vset.pattern.permute.xlu0 2
    %91 = vperm.xlu0 %90, %v80
    %v92 = vpop.permute.xlu0 %91
    %vm93 = vcmp.eq.s32.totalorder %v26, %v83
    %vm94 = vcmp.eq.s32.totalorder %v26, %v86
    %vm95 = vcmp.eq.s32.totalorder %v26, %v89
    %vm96 = vcmp.eq.s32.totalorder %v26, %v92
    %vm97 = vmor %vm71, %vm93
    %vm98 = vmor %vm72, %vm94
    %vm99 = vmor %vm73, %vm95
    %vm100 = vmor %vm74, %vm96
    %s101 = sld [smem:[#allocation3 + $0x3]]
    %v102 = vstv %s101
    %v103 = vadd.s32 %v21, %v102
    %v104 = vadd.s32 %v22, %v102
    %v105 = vadd.s32 %v23, %v102
    %v106 = vadd.s32 %v24, %v102
    %107 = vset.pattern.permute.xlu0 3
    %108 = vperm.xlu0 %107, %v103
    %v109 = vpop.permute.xlu0 %108
    %110 = vset.pattern.permute.xlu0 3
    %111 = vperm.xlu0 %110, %v104
    %v112 = vpop.permute.xlu0 %111
    %113 = vset.pattern.permute.xlu0 3
    %114 = vperm.xlu0 %113, %v105
    %v115 = vpop.permute.xlu0 %114
    %116 = vset.pattern.permute.xlu0 3
    %117 = vperm.xlu0 %116, %v106
    %v118 = vpop.permute.xlu0 %117
    %vm119 = vcmp.eq.s32.totalorder %v26, %v109
    %vm120 = vcmp.eq.s32.totalorder %v26, %v112
    %vm121 = vcmp.eq.s32.totalorder %v26, %v115
    %vm122 = vcmp.eq.s32.totalorder %v26, %v118
    %vm123 = vmor %vm97, %vm119
    %vm124 = vmor %vm98, %vm120
    %vm125 = vmor %vm99, %vm121
    %vm126 = vmor %vm100, %vm122
    %v127 = vsel %vm123, 1, 0
    %v128 = vsel %vm124, 1, 0
    %v129 = vsel %vm125, 1, 0
    %v130 = vsel %vm126, 1, 0
    %v131 = vcvt.s32.f32 %v127
    %v132 = vcvt.s32.f32 %v128
    %v133 = vcvt.s32.f32 %v129
    %v134 = vcvt.s32.f32 %v130
    %v135 = vpack.c.bf16 %v132, %v131
    %v136 = vpack.c.bf16 %v134, %v133
    %v137 = vld [vmem:[%s2] sm:$0xf]
    %v138 = vld [vmem:[%s2 + $0x4] sm:$0xf]
    %v139 = vld [vmem:[%s2 + $0x8] sm:$0xf]
    %v140 = vld [vmem:[%s2 + $0xc] sm:$0xf]
    %v141 = vld [vmem:[%s2 + $0x10] sm:$0xf]
    %v142 = vld [vmem:[%s2 + $0x14] sm:$0xf]
    %v143 = vld [vmem:[%s2 + $0x18] sm:$0xf]
    %v144 = vld [vmem:[%s2 + $0x1c] sm:$0xf]
    %v145 = vld [vmem:[%s2 + $0x20] sm:$0xf]
    %v146 = vld [vmem:[%s2 + $0x24] sm:$0xf]
    %v147 = vld [vmem:[%s2 + $0x28] sm:$0xf]
    %v148 = vld [vmem:[%s2 + $0x2c] sm:$0xf]
    %v149 = vld [vmem:[%s2 + $0x30] sm:$0xf]
    %v150 = vld [vmem:[%s2 + $0x34] sm:$0xf]
    %v151 = vld [vmem:[%s2 + $0x38] sm:$0xf]
    %v152 = vld [vmem:[%s2 + $0x3c] sm:$0xf]
    %v169 = vunpack.c.l.b16 %v137
    %v170 = vunpack.c.l.b16 %v138
    %v171 = vunpack.c.l.b16 %v139
    %v172 = vunpack.c.l.b16 %v140
    %v173 = vunpack.c.l.b16 %v141
    %v174 = vunpack.c.l.b16 %v142
    %v175 = vunpack.c.l.b16 %v143
    %v176 = vunpack.c.l.b16 %v144
    %v177 = vunpack.c.l.b16 %v145
    %v178 = vunpack.c.l.b16 %v146
    %v179 = vunpack.c.l.b16 %v147
    %v180 = vunpack.c.l.b16 %v148
    %v181 = vunpack.c.l.b16 %v149
    %v182 = vunpack.c.l.b16 %v150
    %v183 = vunpack.c.l.b16 %v151
    %v184 = vunpack.c.l.b16 %v152
    %v185 = vpack.c.b16 %v170, %v169
    %v186 = vpack.c.b16 %v172, %v171
    %v187 = vpack.c.b16 %v174, %v173
    %v188 = vpack.c.b16 %v176, %v175
    %v189 = vpack.c.b16 %v178, %v177
    %v190 = vpack.c.b16 %v180, %v179
    %v191 = vpack.c.b16 %v182, %v181
    %v192 = vpack.c.b16 %v184, %v183
    %201 = vmatpush.bf16.msra.mxu0 %v192
    %202 = vmatpush.bf16.msra.mxu0 %v191
    %203 = vmatpush.bf16.msra.mxu0 %v190
    %204 = vmatpush.bf16.msra.mxu0 %v189
    %205 = vmatpush.bf16.msra.mxu0 %v188
    %206 = vmatpush.bf16.msra.mxu0 %v187
    %207 = vmatpush.bf16.msra.mxu0 %v186
    %208 = vmatpush.bf16.msra.mxu0 %v185
    %209 = vmatmul.bf16.gmra.mxu0 %v135
    %v210 = vpop.f32.mrf.mxu0
    %v211 = vadd.f32 0.0, %v210
    %v212 = vpop.f32.mrf.mxu0
    %v213 = vadd.f32 0.0, %v212
    %214 = vmatmul.bf16.gmra.mxu0 %v136
    %v215 = vpop.f32.mrf.mxu0
    %v216 = vadd.f32 0.0, %v215
    %v217 = vpop.f32.mrf.mxu0
    %v218 = vadd.f32 0.0, %v217
    %219 = vdwg.mxu0
    %vm220 = vcmask 261120
    %221 = vst.msk [vmem:[#allocation4] sm:$0xff] %vm220, %v211
    %222 = vst.msk [vmem:[#allocation4 + $0x8] sm:$0xff] %vm220, %v213
    %223 = vst.msk [vmem:[#allocation4 + $0x10] sm:$0xff] %vm220, %v216
    %224 = vst.msk [vmem:[#allocation4 + $0x18] sm:$0xff] %vm220, %v218
    // Predicated region
    $region10: #{tpu_custom_call.1} parent=1 // pred_check
      _
    $region11: #{tpu_custom_call.1} parent=1 // pred_check_branch
      %226 = sbr.rel (0) target = $region13
    $region12: #{tpu_custom_call.1} parent=1 // pred_region
      %228 = vsyncadd [#allocation5], 0
      %s229 = sshll.u32 [#allocation4], 4
      %s230 = int_to_ptr.vmem [resolvable:$true] %s229
      %s231 = sshll.u32 %s3, 4
      %s232 = int_to_ptr.hbm [resolvable:$true] %s231
      %237 = dma.vmem_to_hbm [thread:$0]  %s230, 512, %s232, [#allocation5], 128, 128, 8
    $region13: #{tpu_custom_call.1} parent=1 // pred_fallthru
      _
    // Predicated region
    $region14: #{tpu_custom_call.1} parent=1 // pred_check
      _
    $region15: #{tpu_custom_call.1} parent=1 // pred_check_branch
      %239 = sbr.rel (0) target = $region17
    $region16: #{tpu_custom_call.1} parent=1 // pred_region
      %241 = dma.done [#allocation5], 512
    $region17: #{tpu_custom_call.1} parent=1 // pred_fallthru
      _
    %242 = vsyncpa [#allocation5], 1

</llo_original>
